<compile_context>
chip_gen: v5e
topology: v5e:2x2
jax: 0.10.0
libtpu: 0.0.40
codegen_flags: <defaults>
</compile_context>

<pallas_src>
import numpy as np

import jax
import jax.numpy as jnp
from jax import lax
from jax.experimental import pallas as pl
from jax.experimental.pallas import tpu as pltpu


def _round_up(x, m):
    return ((x + m - 1) // m) * m


# --------------------------------------------------------------------------
# Stage 1: low-rank steer projection, run exactly once per row tile.
# --------------------------------------------------------------------------
def _lowrank_project_kernel(x_ref, sv_ref, p1_ref, p2_ref, out_ref):
    """x_ref : (TM, D)   f32  hidden-state rows (B*T folded)
    sv_ref  : (TM, S*R)  f32  epsilon * steer_values, expanded per rank column
    p1_ref  : (D, S*R)   f32  projector1 flattened over (steer, rank)
    p2_ref  : (S*R, D)   f32  projector2 flattened over (steer, rank)
    out_ref : (TM, D)    bf16 projected rows = x + eps*delta, cast once here."""
    x = x_ref[...]                                                         # (TM, D)
    tmp = jnp.dot(x, p1_ref[...], preferred_element_type=jnp.float32)     # (TM, SR)
    tmp = tmp * sv_ref[...]
    delta = jnp.dot(tmp, p2_ref[...], preferred_element_type=jnp.float32)  # (TM, D)
    out_ref[...] = (x + delta).astype(out_ref.dtype)


# --------------------------------------------------------------------------
# Stage 2: LM-head matmul.  Vocab is the slow grid axis, so each (tv, D)
# weight tile stays resident across all row tiles and is fetched once.
# --------------------------------------------------------------------------
def _lmhead_matmul_kernel(px_ref, w_ref, out_ref):
    """px_ref: (TM, D) bf16; w_ref: (TV, D) bf16 (NOT transposed);
    out_ref: (TM, TV)."""
    logits = lax.dot_general(
        px_ref[...], w_ref[...],
        dimension_numbers=(((1,), (1,)), ((), ())),
        preferred_element_type=jnp.float32)
    out_ref[...] = logits.astype(out_ref.dtype)


def projected_adaptor_forward(state, steer_values, projector1, projector2,
                              lm_head_weight, epsilon, *,
                              tm=None, tv=None, out_dtype=jnp.float32):
    """state: (B,T,D); steer_values: (B,S); projector{1,2}: (S,D,R);
    lm_head_weight: (V,D).  Returns logits (B,T,V) in `out_dtype`."""
    B, T, D = state.shape
    S, _, R = projector1.shape
    V, _ = lm_head_weight.shape
    SR = S * R
    rows = B * T

    # ---- hardware query -------------------------------------------------
    try:
        vmem_cap = int(pltpu.get_tpu_info().vmem_capacity_bytes)
    except Exception:
        vmem_cap = 64 * 1024 * 1024                 # v7x-safe fallback
    try:
        kind = jax.devices()[0].device_kind.lower()
    except Exception:
        kind = ""
    # v5-class MXU is 128-wide -> tm=256 buys nothing and doubles row VMEM.
    tm_cap = 128 if "v5" in kind else 256

    # ---- tile sizing -----------------------------------------------------
    if tm is None:
        tm = min(tm_cap, _round_up(rows, 128))       # MXU-aligned row tiles
    tm = max(8, _round_up(tm, 8))

    out_bytes = jnp.dtype(out_dtype).itemsize
    budget = int(vmem_cap * 0.70)

    def _vmem_est(tv_):
        # double-buffered bf16 row tile + bf16 weight tile + output tile
        return 2 * (tm * D * 2 + tv_ * D * 2 + tm * tv_ * out_bytes)

    if tv is None:
        tv = 128
        for cand in (4096, 2048, 1024, 512, 256, 128):
            if _vmem_est(cand) <= budget:
                tv = cand
                break
        tv = min(tv, _round_up(V, 128))
        if V > 256:
            # keep >= 2 vocab tiles so v7x megacore can shard the slow axis.
            tv = min(tv, max(128, _round_up(-(-V // 2), 128)))
    tv = max(128, _round_up(tv, 128))

    rows_p = _round_up(rows, tm)
    v_p = _round_up(V, tv)

    # ---- cheap wrapper-side prep (small arrays only; no weight transpose) --
    x = state.reshape(rows, D).astype(jnp.float32)
    sv_rows = jnp.repeat(steer_values.astype(jnp.float32) * float(epsilon),
                         T, axis=0)                                     # (rows, S)
    sv_exp = jnp.repeat(sv_rows, R, axis=1)                             # (rows, S*R)
    p1_flat = projector1.astype(jnp.float32).transpose(1, 0, 2).reshape(D, SR)
    p2_flat = projector2.astype(jnp.float32).transpose(0, 2, 1).reshape(SR, D)
    w_bf16 = lm_head_weight.astype(jnp.bfloat16)                        # (V, D)

    if rows_p != rows:
        x = jnp.pad(x, ((0, rows_p - rows), (0, 0)))
        sv_exp = jnp.pad(sv_exp, ((0, rows_p - rows), (0, 0)))
    if v_p != V:
        w_bf16 = jnp.pad(w_bf16, ((0, v_p - V), (0, 0)))

    # ---- Stage 1: projected rows (bf16), one pass over the rows ----------
    pro_vmem = 2 * (tm * D * 4 + tm * SR * 4 + tm * D * 2) + 4 * D * SR * 4
    pro_limit = int(min(vmem_cap * 9 // 10, max(pro_vmem + (8 << 20), 32 << 20)))

    projected = pl.pallas_call(
        _lowrank_project_kernel,
        out_shape=jax.ShapeDtypeStruct((rows_p, D), jnp.bfloat16),
        grid_spec=pltpu.PrefetchScalarGridSpec(
            num_scalar_prefetch=0,
            grid=(rows_p // tm,),
            in_specs=[
                pl.BlockSpec((tm, D), lambda r: (r, 0)),    # state rows
                pl.BlockSpec((tm, SR), lambda r: (r, 0)),   # eps*steer per row
                pl.BlockSpec((D, SR), lambda r: (0, 0)),    # P1 flat (tiny)
                pl.BlockSpec((SR, D), lambda r: (0, 0)),    # P2 flat (tiny)
            ],
            out_specs=pl.BlockSpec((tm, D), lambda r: (r, 0)),
        ),
        compiler_params=pltpu.CompilerParams(
            dimension_semantics=("parallel",),
            vmem_limit_bytes=pro_limit),
        cost_estimate=pl.CostEstimate(
            flops=int(4 * rows_p * D * SR),
            transcendentals=0,
            bytes_accessed=int(rows_p * D * 4 + rows_p * D * 2
                               + rows_p * SR * 4 + 2 * D * SR * 4)),
    )(x, sv_exp, p1_flat, p2_flat)

    # ---- Stage 2: LM-head matmul (vocab slow axis, weights streamed once) --
    mm_vmem = _vmem_est(tv)
    mm_limit = int(min(vmem_cap * 9 // 10, max(mm_vmem + (8 << 20), 32 << 20)))
    grid = (v_p // tv, rows_p // tm)

    out = pl.pallas_call(
        _lmhead_matmul_kernel,
        out_shape=jax.ShapeDtypeStruct((rows_p, v_p), out_dtype),
        grid_spec=pltpu.PrefetchScalarGridSpec(
            num_scalar_prefetch=0,
            grid=grid,
            in_specs=[
                pl.BlockSpec((tm, D), lambda v, r: (r, 0)),   # bf16 projected rows
                pl.BlockSpec((tv, D), lambda v, r: (v, 0)),   # bf16 lm_head tile
            ],
            out_specs=pl.BlockSpec((tm, tv), lambda v, r: (r, v)),
        ),
        compiler_params=pltpu.CompilerParams(
            dimension_semantics=("parallel", "parallel"),
            vmem_limit_bytes=mm_limit),
        cost_estimate=pl.CostEstimate(
            flops=int(2 * rows_p * D * v_p),
            transcendentals=0,
            bytes_accessed=int(v_p * D * 2 + (v_p // tv) * rows_p * D * 2
                               + rows_p * v_p * out_bytes)),
    )(projected, w_bf16)

    return out[:rows, :V].reshape(B, T, V)


def reference_forward(state, steer_values, projector1, projector2,
                      lm_head_weight, epsilon):
    # Mirrors the PyTorch multiply/output branch with jnp ops.
    delta = jnp.einsum("btd,sdr->bstr", state, projector1)
    delta = delta * steer_values[:, :, None, None]
    delta = jnp.einsum("bstr,sdr->bstd", delta, projector2).sum(axis=1)   # (B,T,D)
    projected = state + epsilon * delta
    # The kernel runs the LM-head matmul bf16-in / f32-acc; mirror that.
    return jnp.einsum("btd,vd->btv",
                      projected.astype(jnp.bfloat16),
                      lm_head_weight.astype(jnp.bfloat16),
                      preferred_element_type=jnp.float32)


if __name__ == "__main__":
    # Small shapes consistent with the module's forward (batch, seq, embed, vocab),
    # chosen so the default (MXU-aligned) tiles still give a multi-tile grid.
    B, T, D, V = 2, 128, 256, 512
    S, R = 2, 4                      # num_steers, rank
    epsilon = 0.01
    init_var = 0.02

    key = jax.random.PRNGKey(0)
    k_state, k_p1, k_p2, k_w, k_sv = jax.random.split(key, 5)

    state = jax.random.normal(k_state, (B, T, D), jnp.float32)
    projector1 = jax.random.normal(k_p1, (S, D, R), jnp.float32) * init_var
    projector2 = jax.random.normal(k_p2, (S, D, R), jnp.float32) * init_var
    lm_head_weight = jax.random.normal(k_w, (V, D), jnp.float32) * 0.05
    # Non-zero steer values so the adaptor path (not the zero-steer shortcut) runs.
    steer_values = jax.random.normal(k_sv, (B, S), jnp.float32)

    # TODO(synk): only the 'multiply'/'output' hot path is implemented; the 'add',
    # 'offset', 'nonlinear' (stateful nn.Dropout) branches, the position='input'
    # path and the host-side zero-steer shortcut are not translated.
    # TODO(synk): optional v7x-only fp8 weight path (halves the dominant HBM
    # stream) is not implemented -- needs quantization machinery + quality gate.

    ref = reference_forward(state, steer_values, projector1, projector2,
                            lm_head_weight, epsilon)

    # 1) Explicit MXU-aligned tiles forcing a 4 (vocab) x 2 (row) grid.
    logits_tiled = projected_adaptor_forward(state, steer_values, projector1,
                                             projector2, lm_head_weight, epsilon,
                                             tm=128, tv=128)
    logits_tiled = jax.block_until_ready(logits_tiled)
    np.testing.assert_allclose(np.asarray(logits_tiled), np.asarray(ref),
                               rtol=2e-2, atol=1e-2)

    # 2) Default auto-sized tiles (VMEM-budgeted tv, >=2 vocab tiles).
    logits = projected_adaptor_forward(state, steer_values, projector1,
                                       projector2, lm_head_weight, epsilon)
    logits = jax.block_until_ready(logits)
    np.testing.assert_allclose(np.asarray(logits), np.asarray(ref),
                               rtol=2e-2, atol=1e-2)

    print("KERNEL_OK")
</pallas_src>

<mosaic_0001>
module attributes {stable_mosaic.version = 11 : i64} {
  func.func @_lowrank_project_kernel(%arg0: i32, %arg1: memref<128x256xf32, #tpu.memory_space<vmem>>, %arg2: memref<128x8xf32, #tpu.memory_space<vmem>>, %arg3: memref<256x8xf32, #tpu.memory_space<vmem>>, %arg4: memref<8x256xf32, #tpu.memory_space<vmem>>, %arg5: memref<128x256xbf16, #tpu.memory_space<vmem>>) attributes {dimension_semantics = [#tpu.dimension_semantics<parallel>], iteration_bounds = array<i64: 2>, scalar_prefetch = 0 : i64, scratch_operands = 0 : i64, tpu.core_type = #tpu.core_type<tc>, window_params = [{transform_indices = @transform_0, window_bounds = array<i64: 128, 256>}, {transform_indices = @transform_1, window_bounds = array<i64: 128, 8>}, {pipeline_mode = #tpu.pipeline_mode<synchronous>, transform_indices = @transform_2, window_bounds = array<i64: 256, 8>}, {pipeline_mode = #tpu.pipeline_mode<synchronous>, transform_indices = @transform_3, window_bounds = array<i64: 8, 256>}, {transform_indices = @transform_4, window_bounds = array<i64: 128, 256>}]} {
    %c0 = arith.constant 0 : index
    %c0_0 = arith.constant 0 : index
    %0 = vector.load %arg1[%c0, %c0_0] : memref<128x256xf32, #tpu.memory_space<vmem>>, vector<128x256xf32>
    %c0_1 = arith.constant 0 : index
    %c0_2 = arith.constant 0 : index
    %1 = vector.load %arg3[%c0_1, %c0_2] : memref<256x8xf32, #tpu.memory_space<vmem>>, vector<256x8xf32>
    %cst = arith.constant dense<0.000000e+00> : vector<128x8xf32>
    %2 = tpu.matmul %0, %1, %cst {dimension_numbers = #tpu.dot_dimension_numbers<[1], [0], [0], [1], [0, 0, 1, 1], [], []>} : vector<128x256xf32>, vector<256x8xf32>, vector<128x8xf32> -> vector<128x8xf32>
    %c0_3 = arith.constant 0 : index
    %c0_4 = arith.constant 0 : index
    %3 = vector.load %arg2[%c0_3, %c0_4] : memref<128x8xf32, #tpu.memory_space<vmem>>, vector<128x8xf32>
    %4 = arith.mulf %2, %3 : vector<128x8xf32>
    %c0_5 = arith.constant 0 : index
    %c0_6 = arith.constant 0 : index
    %5 = vector.load %arg4[%c0_5, %c0_6] : memref<8x256xf32, #tpu.memory_space<vmem>>, vector<8x256xf32>
    %cst_7 = arith.constant dense<0.000000e+00> : vector<128x256xf32>
    %6 = tpu.matmul %4, %5, %cst_7 {dimension_numbers = #tpu.dot_dimension_numbers<[1], [0], [0], [1], [0, 0, 1, 1], [], []>} : vector<128x8xf32>, vector<8x256xf32>, vector<128x256xf32> -> vector<128x256xf32>
    %7 = arith.addf %0, %6 : vector<128x256xf32>
    %8 = arith.truncf %7 : vector<128x256xf32> to vector<128x256xbf16>
    %c0_8 = arith.constant 0 : index
    %c0_9 = arith.constant 0 : index
    %9 = vector.load %arg5[%c0_8, %c0_9] : memref<128x256xbf16, #tpu.memory_space<vmem>>, vector<128x256xbf16>
    tpu.vector_store %arg5[%c0_8, %c0_9], %8 {strides = array<i32>} : memref<128x256xbf16, #tpu.memory_space<vmem>>, vector<128x256xbf16>,
    return
  }
  func.func @transform_0(%arg0: i32) -> (i32, i32) {
    %c0_i32 = arith.constant 0 : i32
    %c0_i32_0 = arith.constant 0 : i32
    return %arg0, %c0_i32 : i32, i32
  }
  func.func @transform_1(%arg0: i32) -> (i32, i32) {
    %c0_i32 = arith.constant 0 : i32
    %c0_i32_0 = arith.constant 0 : i32
    return %arg0, %c0_i32 : i32, i32
  }
  func.func @transform_2(%arg0: i32) -> (i32, i32) {
    %c0_i32 = arith.constant 0 : i32
    %c0_i32_0 = arith.constant 0 : i32
    %c0_i32_1 = arith.constant 0 : i32
    return %c0_i32, %c0_i32_0 : i32, i32
  }
  func.func @transform_3(%arg0: i32) -> (i32, i32) {
    %c0_i32 = arith.constant 0 : i32
    %c0_i32_0 = arith.constant 0 : i32
    %c0_i32_1 = arith.constant 0 : i32
    return %c0_i32, %c0_i32_0 : i32, i32
  }
  func.func @transform_4(%arg0: i32) -> (i32, i32) {
    %c0_i32 = arith.constant 0 : i32
    %c0_i32_0 = arith.constant 0 : i32
    return %arg0, %c0_i32 : i32, i32
  }
}

</mosaic_0001>

<llo_original>
// kernel: tpu_custom_call.1
$region0: #{tpu_custom_call.1}
  #allocation0 [shape = 'u32[]', space=smem, size = 0x4, offset = 0x4, fixed_abs, tag = 'smem constant byte address 0x4 - core index']
  #allocation1 [shape = 'u32[72,128]{1,0:T(1,128)}', space=vmem, size = 0x9000, scoped, tag = 'internal scratch']
  %s0 = inlined_call_operand.vmem [shape: f32[256,256], index: 0, kind: input, shape index: {}]
  %s1 = inlined_call_operand.vmem [shape: f32[256,8], index: 1, kind: input, shape index: {}]
  %s2 = inlined_call_operand.vmem [shape: f32[256,8], index: 2, kind: input, shape index: {}]
  %s3 = inlined_call_operand.vmem [shape: f32[8,256], index: 3, kind: input, shape index: {}]
  %s4 = inlined_call_operand.hbm [shape: bf16[256,256], index: 4, kind: output, shape index: {}]
  %s5 = sld [smem:[#allocation0]]
  $region49: #{tpu_custom_call.1} parent=0
    _
  %s7 = ssub.s32 1, %s5
  %s8 = scalar_select 0, %s7, %s5
  $region1: #{tpu_custom_call.1} parent=0
    #allocation2 [shape = 'u8[131072]{0}', space=vmem, size = 0x20000, scoped, tag = 'output window, operand 0']
    #allocation3 [shape = 's32[2]{0}', space=sflag, size = 0x8, scoped, tag = 'scoped memory for tpu_custom_call.1']
    %9 = vsyncpa [#allocation3], 0
    %s10 = scalar_lea.sflag [#allocation3], 1
    %11 = vsyncpa %s10, 0
    loop: start=0, step=1, limit=4
    $region2: #{tpu_custom_call.1} parent=1 // loop_pre_header
      _
    $region3: #{tpu_custom_call.1} parent=1 // loop_header
      %s13 = sphi 0, %s17
      %p14 = scmp.ge.s32.totalorder %s13, 4
      %s23 = sphi 0, %s25
      %s26 = sphi 0, %s23
      %s27 = sphi 0, %s26
      %s43 = sphi 0, %s27
      %s49 = sphi 0, %s51
      %s52 = sphi 0, %s49
      %s53 = sphi 0, %s52
      %s69 = sphi 0, %s53
      %s73 = sphi 0, %s73
      %s75 = sphi 0, %s73
      %s76 = sphi 0, %s75
      %s90 = sphi 0, %s76
      %s94 = sphi 0, %s94
      %s96 = sphi 0, %s94
      %s97 = sphi 0, %s96
      %s111 = sphi 0, %s97
      %s117 = sphi 0, %s119
      %s120 = sphi 0, %s117
      %s121 = sphi 0, %s120
      %s137 = sphi 0, %s121
    $region4: #{tpu_custom_call.1} parent=1 // loop_header_branch
      %16 = sbr.rel (%p14) target = $region8
    $region5: #{tpu_custom_call.1} parent=1 // loop_body
      %s18 = ssub.s32 %s13, 1
      %s19 = ssub.s32 %s13, 2
      %s20 = sadd.s32 %s13, 1
      %s21 = ssub.s32 %s13, %s20
      %p22 = scmp.eq.s32.totalorder %s21, 0
      %s24 = sadd.s32 %s23, 1
      %s25 = scalar_select %p22, %s23, %s24
      %p28 = pneg %p22
      %p29 = scmp.eq.s32.totalorder %s13, 1
      %p30 = por %p28, %p29
      %p31 = scmp.ne.s32.totalorder %s23, %s26
      %p32 = scmp.eq.s32.totalorder %s13, 0
      %p33 = por %p31, %p32
      %p34 = scmp.ne.s32.totalorder %s23, %s26
      %p35 = scmp.eq.s32.totalorder %s18, 1
      %p36 = por %p34, %p35
      %p37 = scmp.ne.s32.totalorder %s26, %s27
      %p38 = scmp.eq.s32.totalorder %s18, 0
      %p39 = por %p37, %p38
      %p40 = scmp.ne.s32.totalorder %s26, %s27
      %p41 = scmp.eq.s32.totalorder %s19, 1
      %p42 = por %p40, %p41
      %p44 = scmp.ne.s32.totalorder %s27, %s43
      %p45 = scmp.eq.s32.totalorder %s19, 0
      %p46 = por %p44, %p45
      %s47 = ssub.s32 %s13, %s20
      %p48 = scmp.eq.s32.totalorder %s47, 0
      %s50 = sadd.s32 %s49, 1
      %s51 = scalar_select %p48, %s49, %s50
      %p54 = pneg %p48
      %p55 = scmp.eq.s32.totalorder %s13, 1
      %p56 = por %p54, %p55
      %p57 = scmp.ne.s32.totalorder %s49, %s52
      %p58 = scmp.eq.s32.totalorder %s13, 0
      %p59 = por %p57, %p58
      %p60 = scmp.ne.s32.totalorder %s49, %s52
      %p61 = scmp.eq.s32.totalorder %s18, 1
      %p62 = por %p60, %p61
      %p63 = scmp.ne.s32.totalorder %s52, %s53
      %p64 = scmp.eq.s32.totalorder %s18, 0
      %p65 = por %p63, %p64
      %p66 = scmp.ne.s32.totalorder %s52, %s53
      %p67 = scmp.eq.s32.totalorder %s19, 1
      %p68 = por %p66, %p67
      %p70 = scmp.ne.s32.totalorder %s53, %s69
      %p71 = scmp.eq.s32.totalorder %s19, 0
      %p72 = por %p70, %p71
      %s74 = sadd.s32 %s73, 1
      %p77 = scmp.eq.s32.totalorder %s13, 1
      %p78 = scmp.ne.s32.totalorder %s73, %s75
      %p79 = scmp.eq.s32.totalorder %s13, 0
      %p80 = por %p78, %p79
      %p81 = scmp.ne.s32.totalorder %s73, %s75
      %p82 = scmp.eq.s32.totalorder %s18, 1
      %p83 = por %p81, %p82
      %p84 = scmp.ne.s32.totalorder %s75, %s76
      %p85 = scmp.eq.s32.totalorder %s18, 0
      %p86 = por %p84, %p85
      %p87 = scmp.ne.s32.totalorder %s75, %s76
      %p88 = scmp.eq.s32.totalorder %s19, 1
      %p89 = por %p87, %p88
      %p91 = scmp.ne.s32.totalorder %s76, %s90
      %p92 = scmp.eq.s32.totalorder %s19, 0
      %p93 = por %p91, %p92
      %s95 = sadd.s32 %s94, 1
      %p98 = scmp.eq.s32.totalorder %s13, 1
      %p99 = scmp.ne.s32.totalorder %s94, %s96
      %p100 = scmp.eq.s32.totalorder %s13, 0
      %p101 = por %p99, %p100
      %p102 = scmp.ne.s32.totalorder %s94, %s96
      %p103 = scmp.eq.s32.totalorder %s18, 1
      %p104 = por %p102, %p103
      %p105 = scmp.ne.s32.totalorder %s96, %s97
      %p106 = scmp.eq.s32.totalorder %s18, 0
      %p107 = por %p105, %p106
      %p108 = scmp.ne.s32.totalorder %s96, %s97
      %p109 = scmp.eq.s32.totalorder %s19, 1
      %p110 = por %p108, %p109
      %p112 = scmp.ne.s32.totalorder %s97, %s111
      %p113 = scmp.eq.s32.totalorder %s19, 0
      %p114 = por %p112, %p113
      %s115 = ssub.s32 %s13, %s20
      %p116 = scmp.eq.s32.totalorder %s115, 0
      %s118 = sadd.s32 %s117, 1
      %s119 = scalar_select %p116, %s117, %s118
      %p122 = pneg %p116
      %p123 = scmp.eq.s32.totalorder %s13, 1
      %p124 = por %p122, %p123
      %p125 = scmp.ne.s32.totalorder %s117, %s120
      %p126 = scmp.eq.s32.totalorder %s13, 0
      %p127 = por %p125, %p126
      %p128 = scmp.ne.s32.totalorder %s117, %s120
      %p129 = scmp.eq.s32.totalorder %s18, 1
      %p130 = por %p128, %p129
      %p131 = scmp.ne.s32.totalorder %s120, %s121
      %p132 = scmp.eq.s32.totalorder %s18, 0
      %p133 = por %p131, %p132
      %p134 = scmp.ne.s32.totalorder %s120, %s121
      %p135 = scmp.eq.s32.totalorder %s19, 1
      %p136 = por %p134, %p135
      %p138 = scmp.ne.s32.totalorder %s121, %s137
      %p139 = scmp.eq.s32.totalorder %s19, 0
      %p140 = por %p138, %p139
      %p141 = scmp.le.s32.totalorder 1, %s13
      %p142 = scmp.lt.s32.totalorder %s13, 3
      %p143 = pnand %p141, %p142
      %p144 = pneg %p143
      // Predicated region
      $region9: #{tpu_custom_call.1} parent=5 // pred_check
        _
      $region10: #{tpu_custom_call.1} parent=5 // pred_check_branch
        %146 = sbr.rel (%p143) target = $region12
      $region11: #{tpu_custom_call.1} parent=5 // pred_region
        %s147 = ssub.s32 %s13, 1
        // Predicated region
        $region13: #{tpu_custom_call.1} parent=11 // pred_check
          %p148 = pneg %p86
        $region14: #{tpu_custom_call.1} parent=11 // pred_check_branch
          %150 = sbr.rel (%p148) target = $region16
        $region15: #{tpu_custom_call.1} parent=11 // pred_region
          _
        $region16: #{tpu_custom_call.1} parent=11 // pred_fallthru
          _
        // Predicated region
        $region17: #{tpu_custom_call.1} parent=11 // pred_check
          %p151 = pneg %p107
        $region18: #{tpu_custom_call.1} parent=11 // pred_check_branch
          %153 = sbr.rel (%p151) target = $region20
        $region19: #{tpu_custom_call.1} parent=11 // pred_region
          _
        $region20: #{tpu_custom_call.1} parent=11 // pred_fallthru
          _
      $region12: #{tpu_custom_call.1} parent=5 // pred_fallthru
        _
      %p154 = scmp.lt.s32.totalorder %s13, 2
      // Predicated region
      $region21: #{tpu_custom_call.1} parent=5 // pred_check
        %p155 = pneg %p154
      $region22: #{tpu_custom_call.1} parent=5 // pred_check_branch
        %157 = sbr.rel (%p155) target = $region24
      $region23: #{tpu_custom_call.1} parent=5 // pred_region
        // Predicated region
        $region25: #{tpu_custom_call.1} parent=23 // pred_check
          %p158 = pneg %p33
        $region26: #{tpu_custom_call.1} parent=23 // pred_check_branch
          %160 = sbr.rel (%p158) target = $region28
        $region27: #{tpu_custom_call.1} parent=23 // pred_region
          %s161 = smul.u32 16, %s13
          %p162 = scmp.lt.s32.totalorder %s161, 31
          %s163 = scalar_select %p162, %s161, 31
          %s164 = smul.addr %s163, 2
          %s165 = smul.addr %s164, 8
          %s166 = scalar_lea.vmem %s0, %s165
          %s167 = smul.u32 16, %s13
        $region28: #{tpu_custom_call.1} parent=23 // pred_fallthru
          _
        // Predicated region
        $region29: #{tpu_custom_call.1} parent=23 // pred_check
          %p168 = pneg %p59
        $region30: #{tpu_custom_call.1} parent=23 // pred_check_branch
          %170 = sbr.rel (%p168) target = $region32
        $region31: #{tpu_custom_call.1} parent=23 // pred_region
          %s171 = smul.u32 16, %s13
          %p172 = scmp.lt.s32.totalorder %s171, 31
          %s173 = scalar_select %p172, %s171, 31
          %s174 = smul.addr %s173, 8
          %s175 = scalar_lea.vmem %s1, %s174
          %s176 = smul.u32 16, %s13
        $region32: #{tpu_custom_call.1} parent=23 // pred_fallthru
          _
      $region24: #{tpu_custom_call.1} parent=5 // pred_fallthru
        _
      %p177 = scmp.le.s32.totalorder 1, %s13
      %p178 = scmp.lt.s32.totalorder %s13, 3
      %p179 = pnand %p177, %p178
      %p180 = pneg %p179
      // Predicated region
      $region33: #{tpu_custom_call.1} parent=5 // pred_check
        _
      $region34: #{tpu_custom_call.1} parent=5 // pred_check_branch
        %182 = sbr.rel (%p179) target = $region36
      $region35: #{tpu_custom_call.1} parent=5 // pred_region
        %s183 = ssub.s32 %s13, 1
        %s184 = smul.u32 16, %s18
        %p185 = scmp.lt.s32.totalorder %s184, 31
        %s186 = scalar_select %p185, %s184, 31
        %s187 = smul.addr %s186, 2
        %s188 = smul.addr %s187, 8
        %s189 = scalar_lea.vmem %s0, %s188
        %p190 = pneg %p39
        %p191 = pneg %p36
        %s192 = smul.u32 16, %s18
        %p193 = scmp.lt.s32.totalorder %s192, 31
        %s194 = scalar_select %p193, %s192, 31
        %s195 = smul.addr %s194, 8
        %s196 = scalar_lea.vmem %s1, %s195
        %p197 = pneg %p65
        %p198 = pneg %p62
        %p199 = pneg %p86
        %p200 = pneg %p83
        %p201 = pneg %p107
        %p202 = pneg %p104
        %p203 = pneg %p133
        %p204 = pneg %p130
        %s205 = sand.u32 %s120, 1
        %s206 = scalar_lea.sflag [#allocation3], %s205
        %s207 = sand.u32 %s120, 1
        %s208 = smul.addr %s207, 128
        %s209 = scalar_lea.vmem [#allocation2], %s208
        %s210 = smul.u32 16, %s18
        %p211 = scmp.lt.s32.totalorder %s210, 31
        %s212 = scalar_select %p211, %s210, 31
        %s213 = smul.addr %s212, 2
        %s214 = smul.addr %s213, 8
        %s215 = scalar_lea.vmem %s0, %s214
        %s216 = smul.u32 16, %s18
        %s217 = smul.u32 16, %s18
        %p218 = scmp.lt.s32.totalorder %s217, 31
        %s219 = scalar_select %p218, %s217, 31
        %s220 = smul.addr %s219, 8
        %s221 = scalar_lea.vmem %s1, %s220
        %s222 = smul.u32 16, %s18
        %s223 = smul.u32 16, %s18
        %v224 = vld [vmem:[%s215] sm:$0xff]
        %v225 = vld [vmem:[%s215 + $0x8] sm:$0xff]
        %v226 = vld [vmem:[%s215 + $0x10] sm:$0xff]
        %v227 = vld [vmem:[%s215 + $0x18] sm:$0xff]
        %v228 = vld [vmem:[%s215 + $0x20] sm:$0xff]
        %v229 = vld [vmem:[%s215 + $0x28] sm:$0xff]
        %v230 = vld [vmem:[%s215 + $0x30] sm:$0xff]
        %v231 = vld [vmem:[%s215 + $0x38] sm:$0xff]
        %v232 = vld [vmem:[%s215 + $0x40] sm:$0xff]
        %v233 = vld [vmem:[%s215 + $0x48] sm:$0xff]
        %v234 = vld [vmem:[%s215 + $0x50] sm:$0xff]
        %v235 = vld [vmem:[%s215 + $0x58] sm:$0xff]
        %v236 = vld [vmem:[%s215 + $0x60] sm:$0xff]
        %v237 = vld [vmem:[%s215 + $0x68] sm:$0xff]
        %v238 = vld [vmem:[%s215 + $0x70] sm:$0xff]
        %v239 = vld [vmem:[%s215 + $0x78] sm:$0xff]
        %v240 = vld [vmem:[%s215 + $0x80] sm:$0xff]
        %v241 = vld [vmem:[%s215 + $0x88] sm:$0xff]
        %v242 = vld [vmem:[%s215 + $0x90] sm:$0xff]
        %v243 = vld [vmem:[%s215 + $0x98] sm:$0xff]
        %v244 = vld [vmem:[%s215 + $0xa0] sm:$0xff]
        %v245 = vld [vmem:[%s215 + $0xa8] sm:$0xff]
        %v246 = vld [vmem:[%s215 + $0xb0] sm:$0xff]
        %v247 = vld [vmem:[%s215 + $0xb8] sm:$0xff]
        %v248 = vld [vmem:[%s215 + $0xc0] sm:$0xff]
        %v249 = vld [vmem:[%s215 + $0xc8] sm:$0xff]
        %v250 = vld [vmem:[%s215 + $0xd0] sm:$0xff]
        %v251 = vld [vmem:[%s215 + $0xd8] sm:$0xff]
        %v252 = vld [vmem:[%s215 + $0xe0] sm:$0xff]
        %v253 = vld [vmem:[%s215 + $0xe8] sm:$0xff]
        %v254 = vld [vmem:[%s215 + $0xf0] sm:$0xff]
        %v255 = vld [vmem:[%s215 + $0xf8] sm:$0xff]
        %v256 = vld [vmem:[%s2] sm:$0xff]
        %v257 = vld [vmem:[%s2 + $0x8] sm:$0xff]
        %v258 = vld [vmem:[%s2 + $0x10] sm:$0xff]
        %v259 = vld [vmem:[%s2 + $0x18] sm:$0xff]
        %v260 = vld [vmem:[%s2 + $0x20] sm:$0xff]
        %v261 = vld [vmem:[%s2 + $0x28] sm:$0xff]
        %v262 = vld [vmem:[%s2 + $0x30] sm:$0xff]
        %v263 = vld [vmem:[%s2 + $0x38] sm:$0xff]
        %v264 = vld [vmem:[%s2 + $0x40] sm:$0xff]
        %v265 = vld [vmem:[%s2 + $0x48] sm:$0xff]
        %v266 = vld [vmem:[%s2 + $0x50] sm:$0xff]
        %v267 = vld [vmem:[%s2 + $0x58] sm:$0xff]
        %v268 = vld [vmem:[%s2 + $0x60] sm:$0xff]
        %v269 = vld [vmem:[%s2 + $0x68] sm:$0xff]
        %v270 = vld [vmem:[%s2 + $0x70] sm:$0xff]
        %v271 = vld [vmem:[%s2 + $0x78] sm:$0xff]
        %v272 = vld [vmem:[%s2 + $0x80] sm:$0xff]
        %v273 = vld [vmem:[%s2 + $0x88] sm:$0xff]
        %v274 = vld [vmem:[%s2 + $0x90] sm:$0xff]
        %v275 = vld [vmem:[%s2 + $0x98] sm:$0xff]
        %v276 = vld [vmem:[%s2 + $0xa0] sm:$0xff]
        %v277 = vld [vmem:[%s2 + $0xa8] sm:$0xff]
        %v278 = vld [vmem:[%s2 + $0xb0] sm:$0xff]
        %v279 = vld [vmem:[%s2 + $0xb8] sm:$0xff]
        %v280 = vld [vmem:[%s2 + $0xc0] sm:$0xff]
        %v281 = vld [vmem:[%s2 + $0xc8] sm:$0xff]
        %v282 = vld [vmem:[%s2 + $0xd0] sm:$0xff]
        %v283 = vld [vmem:[%s2 + $0xd8] sm:$0xff]
        %v284 = vld [vmem:[%s2 + $0xe0] sm:$0xff]
        %v285 = vld [vmem:[%s2 + $0xe8] sm:$0xff]
        %v286 = vld [vmem:[%s2 + $0xf0] sm:$0xff]
        %v287 = vld [vmem:[%s2 + $0xf8] sm:$0xff]
        %288 = vmatpush.msra.mxu0 %v271
        %289 = vmatpush.msra.mxu0 %v270
        %290 = vmatpush.msra.mxu0 %v269
        %291 = vmatpush.msra.mxu0 %v268
        %292 = vmatpush.msra.mxu0 %v267
        %293 = vmatpush.msra.mxu0 %v266
        %294 = vmatpush.msra.mxu0 %v265
        %295 = vmatpush.msra.mxu0 %v264
        %296 = vmatpush.msra.mxu0 %v263
        %297 = vmatpush.msra.mxu0 %v262
        %298 = vmatpush.msra.mxu0 %v261
        %299 = vmatpush.msra.mxu0 %v260
        %300 = vmatpush.msra.mxu0 %v259
        %301 = vmatpush.msra.mxu0 %v258
        %302 = vmatpush.msra.mxu0 %v257
        %303 = vmatpush.msra.mxu0 %v256
        %304 = vmatmul.f32.gmra.mxu0 %v224
        %v305 = vpop.f32.mrf.mxu0
        %v306 = vadd.f32 0.0, %v305
        %307 = vmatmul.f32.gmra.mxu0 %v226
        %v308 = vpop.f32.mrf.mxu0
        %v309 = vadd.f32 0.0, %v308
        %310 = vmatmul.f32.gmra.mxu0 %v228
        %v311 = vpop.f32.mrf.mxu0
        %v312 = vadd.f32 0.0, %v311
        %313 = vmatmul.f32.gmra.mxu0 %v230
        %v314 = vpop.f32.mrf.mxu0
        %v315 = vadd.f32 0.0, %v314
        %316 = vmatmul.f32.gmra.mxu0 %v232
        %v317 = vpop.f32.mrf.mxu0
        %v318 = vadd.f32 0.0, %v317
        %319 = vmatmul.f32.gmra.mxu0 %v234
        %v320 = vpop.f32.mrf.mxu0
        %v321 = vadd.f32 0.0, %v320
        %322 = vmatmul.f32.gmra.mxu0 %v236
        %v323 = vpop.f32.mrf.mxu0
        %v324 = vadd.f32 0.0, %v323
        %325 = vmatmul.f32.gmra.mxu0 %v238
        %v326 = vpop.f32.mrf.mxu0
        %v327 = vadd.f32 0.0, %v326
        %328 = vmatmul.f32.gmra.mxu0 %v240
        %v329 = vpop.f32.mrf.mxu0
        %v330 = vadd.f32 0.0, %v329
        %331 = vmatmul.f32.gmra.mxu0 %v242
        %v332 = vpop.f32.mrf.mxu0
        %v333 = vadd.f32 0.0, %v332
        %334 = vmatmul.f32.gmra.mxu0 %v244
        %v335 = vpop.f32.mrf.mxu0
        %v336 = vadd.f32 0.0, %v335
        %337 = vmatmul.f32.gmra.mxu0 %v246
        %v338 = vpop.f32.mrf.mxu0
        %v339 = vadd.f32 0.0, %v338
        %340 = vmatmul.f32.gmra.mxu0 %v248
        %v341 = vpop.f32.mrf.mxu0
        %v342 = vadd.f32 0.0, %v341
        %343 = vmatmul.f32.gmra.mxu0 %v250
        %v344 = vpop.f32.mrf.mxu0
        %v345 = vadd.f32 0.0, %v344
        %346 = vmatmul.f32.gmra.mxu0 %v252
        %v347 = vpop.f32.mrf.mxu0
        %v348 = vadd.f32 0.0, %v347
        %349 = vmatmul.f32.gmra.mxu0 %v254
        %v350 = vpop.f32.mrf.mxu0
        %v351 = vadd.f32 0.0, %v350
        %352 = vdwg.mxu0
        %353 = vmatpush.msra.mxu0 %v287
        %354 = vmatpush.msra.mxu0 %v286
        %355 = vmatpush.msra.mxu0 %v285
        %356 = vmatpush.msra.mxu0 %v284
        %357 = vmatpush.msra.mxu0 %v283
        %358 = vmatpush.msra.mxu0 %v282
        %359 = vmatpush.msra.mxu0 %v281
        %360 = vmatpush.msra.mxu0 %v280
        %361 = vmatpush.msra.mxu0 %v279
        %362 = vmatpush.msra.mxu0 %v278
        %363 = vmatpush.msra.mxu0 %v277
        %364 = vmatpush.msra.mxu0 %v276
        %365 = vmatpush.msra.mxu0 %v275
        %366 = vmatpush.msra.mxu0 %v274
        %367 = vmatpush.msra.mxu0 %v273
        %368 = vmatpush.msra.mxu0 %v272
        %369 = vmatmul.f32.gmra.mxu0 %v225
        %v370 = vpop.f32.mrf.mxu0
        %v371 = vadd.f32 %v306, %v370
        %372 = vmatmul.f32.gmra.mxu0 %v227
        %v373 = vpop.f32.mrf.mxu0
        %v374 = vadd.f32 %v309, %v373
        %375 = vmatmul.f32.gmra.mxu0 %v229
        %v376 = vpop.f32.mrf.mxu0
        %v377 = vadd.f32 %v312, %v376
        %378 = vmatmul.f32.gmra.mxu0 %v231
        %v379 = vpop.f32.mrf.mxu0
        %v380 = vadd.f32 %v315, %v379
        %381 = vmatmul.f32.gmra.mxu0 %v233
        %v382 = vpop.f32.mrf.mxu0
        %v383 = vadd.f32 %v318, %v382
        %384 = vmatmul.f32.gmra.mxu0 %v235
        %v385 = vpop.f32.mrf.mxu0
        %v386 = vadd.f32 %v321, %v385
        %387 = vmatmul.f32.gmra.mxu0 %v237
        %v388 = vpop.f32.mrf.mxu0
        %v389 = vadd.f32 %v324, %v388
        %390 = vmatmul.f32.gmra.mxu0 %v239
        %v391 = vpop.f32.mrf.mxu0
        %v392 = vadd.f32 %v327, %v391
        %393 = vmatmul.f32.gmra.mxu0 %v241
        %v394 = vpop.f32.mrf.mxu0
        %v395 = vadd.f32 %v330, %v394
        %396 = vmatmul.f32.gmra.mxu0 %v243
        %v397 = vpop.f32.mrf.mxu0
        %v398 = vadd.f32 %v333, %v397
        %399 = vmatmul.f32.gmra.mxu0 %v245
        %v400 = vpop.f32.mrf.mxu0
        %v401 = vadd.f32 %v336, %v400
        %402 = vmatmul.f32.gmra.mxu0 %v247
        %v403 = vpop.f32.mrf.mxu0
        %v404 = vadd.f32 %v339, %v403
        %405 = vmatmul.f32.gmra.mxu0 %v249
        %v406 = vpop.f32.mrf.mxu0
        %v407 = vadd.f32 %v342, %v406
        %408 = vmatmul.f32.gmra.mxu0 %v251
        %v409 = vpop.f32.mrf.mxu0
        %v410 = vadd.f32 %v345, %v409
        %411 = vmatmul.f32.gmra.mxu0 %v253
        %v412 = vpop.f32.mrf.mxu0
        %v413 = vadd.f32 %v348, %v412
        %414 = vmatmul.f32.gmra.mxu0 %v255
        %v415 = vpop.f32.mrf.mxu0
        %v416 = vadd.f32 %v351, %v415
        %417 = vdwg.mxu0
        %v418 = vld [vmem:[%s221] sm:$0xff]
        %v419 = vld [vmem:[%s221 + $0x8] sm:$0xff]
        %v420 = vld [vmem:[%s221 + $0x10] sm:$0xff]
        %v421 = vld [vmem:[%s221 + $0x18] sm:$0xff]
        %v422 = vld [vmem:[%s221 + $0x20] sm:$0xff]
        %v423 = vld [vmem:[%s221 + $0x28] sm:$0xff]
        %v424 = vld [vmem:[%s221 + $0x30] sm:$0xff]
        %v425 = vld [vmem:[%s221 + $0x38] sm:$0xff]
        %v426 = vld [vmem:[%s221 + $0x40] sm:$0xff]
        %v427 = vld [vmem:[%s221 + $0x48] sm:$0xff]
        %v428 = vld [vmem:[%s221 + $0x50] sm:$0xff]
        %v429 = vld [vmem:[%s221 + $0x58] sm:$0xff]
        %v430 = vld [vmem:[%s221 + $0x60] sm:$0xff]
        %v431 = vld [vmem:[%s221 + $0x68] sm:$0xff]
        %v432 = vld [vmem:[%s221 + $0x70] sm:$0xff]
        %v433 = vld [vmem:[%s221 + $0x78] sm:$0xff]
        %v434 = vmul.f32 %v371, %v418
        %v435 = vmul.f32 %v374, %v419
        %v436 = vmul.f32 %v377, %v420
        %v437 = vmul.f32 %v380, %v421
        %v438 = vmul.f32 %v383, %v422
        %v439 = vmul.f32 %v386, %v423
        %v440 = vmul.f32 %v389, %v424
        %v441 = vmul.f32 %v392, %v425
        %v442 = vmul.f32 %v395, %v426
        %v443 = vmul.f32 %v398, %v427
        %v444 = vmul.f32 %v401, %v428
        %v445 = vmul.f32 %v404, %v429
        %v446 = vmul.f32 %v407, %v430
        %v447 = vmul.f32 %v410, %v431
        %v448 = vmul.f32 %v413, %v432
        %v449 = vmul.f32 %v416, %v433
        %v450 = vld [vmem:[%s3] sm:$0xff]
        %v451 = vld [vmem:[%s3 + $0x8] sm:$0xff]
        %vm452 = vcmask 64512
        %v454 = vsel %vm452, %v434, 0
        %v457 = vsel %vm452, %v435, 0
        %v460 = vsel %vm452, %v436, 0
        %v463 = vsel %vm452, %v437, 0
        %v466 = vsel %vm452, %v438, 0
        %v469 = vsel %vm452, %v439, 0
        %v472 = vsel %vm452, %v440, 0
        %v475 = vsel %vm452, %v441, 0
        %v478 = vsel %vm452, %v442, 0
        %v481 = vsel %vm452, %v443, 0
        %v484 = vsel %vm452, %v444, 0
        %v487 = vsel %vm452, %v445, 0
        %v490 = vsel %vm452, %v446, 0
        %v493 = vsel %vm452, %v447, 0
        %v496 = vsel %vm452, %v448, 0
        %v499 = vsel %vm452, %v449, 0
        %501 = vmatpush.msra.mxu0 0.0
        %502 = vmatpush.msra.mxu0 0.0
        %503 = vmatpush.msra.mxu0 0.0
        %504 = vmatpush.msra.mxu0 0.0
        %505 = vmatpush.msra.mxu0 0.0
        %506 = vmatpush.msra.mxu0 0.0
        %507 = vmatpush.msra.mxu0 0.0
        %508 = vmatpush.msra.mxu0 0.0
        %509 = vmatpush.msra.mxu0 0.0
        %510 = vmatpush.msra.mxu0 0.0
        %511 = vmatpush.msra.mxu0 0.0
        %512 = vmatpush.msra.mxu0 0.0
        %513 = vmatpush.msra.mxu0 0.0
        %514 = vmatpush.msra.mxu0 0.0
        %515 = vmatpush.msra.mxu0 0.0
        %516 = vmatpush.msra.mxu0 %v450
        %517 = vmatmul.f32.gmra.mxu0 %v454
        %v518 = vpop.f32.mrf.mxu0
        %v519 = vadd.f32 0.0, %v518
        %520 = vmatmul.f32.gmra.mxu0 %v457
        %v521 = vpop.f32.mrf.mxu0
        %v522 = vadd.f32 0.0, %v521
        %523 = vmatmul.f32.gmra.mxu0 %v460
        %v524 = vpop.f32.mrf.mxu0
        %v525 = vadd.f32 0.0, %v524
        %526 = vmatmul.f32.gmra.mxu0 %v463
        %v527 = vpop.f32.mrf.mxu0
        %v528 = vadd.f32 0.0, %v527
        %529 = vmatmul.f32.gmra.mxu0 %v466
        %v530 = vpop.f32.mrf.mxu0
        %v531 = vadd.f32 0.0, %v530
        %532 = vmatmul.f32.gmra.mxu0 %v469
        %v533 = vpop.f32.mrf.mxu0
        %v534 = vadd.f32 0.0, %v533
        %535 = vmatmul.f32.gmra.mxu0 %v472
        %v536 = vpop.f32.mrf.mxu0
        %v537 = vadd.f32 0.0, %v536
        %538 = vmatmul.f32.gmra.mxu0 %v475
        %v539 = vpop.f32.mrf.mxu0
        %v540 = vadd.f32 0.0, %v539
        %541 = vmatmul.f32.gmra.mxu0 %v478
        %v542 = vpop.f32.mrf.mxu0
        %v543 = vadd.f32 0.0, %v542
        %544 = vmatmul.f32.gmra.mxu0 %v481
        %v545 = vpop.f32.mrf.mxu0
        %v546 = vadd.f32 0.0, %v545
        %547 = vmatmul.f32.gmra.mxu0 %v484
        %v548 = vpop.f32.mrf.mxu0
        %v549 = vadd.f32 0.0, %v548
        %550 = vmatmul.f32.gmra.mxu0 %v487
        %v551 = vpop.f32.mrf.mxu0
        %v552 = vadd.f32 0.0, %v551
        %553 = vmatmul.f32.gmra.mxu0 %v490
        %v554 = vpop.f32.mrf.mxu0
        %v555 = vadd.f32 0.0, %v554
        %556 = vmatmul.f32.gmra.mxu0 %v493
        %v557 = vpop.f32.mrf.mxu0
        %v558 = vadd.f32 0.0, %v557
        %559 = vmatmul.f32.gmra.mxu0 %v496
        %v560 = vpop.f32.mrf.mxu0
        %v561 = vadd.f32 0.0, %v560
        %562 = vmatmul.f32.gmra.mxu0 %v499
        %v563 = vpop.f32.mrf.mxu0
        %v564 = vadd.f32 0.0, %v563
        %565 = vdwg.mxu0
        %566 = vmatpush.msra.mxu0 0.0
        %567 = vmatpush.msra.mxu0 0.0
        %568 = vmatpush.msra.mxu0 0.0
        %569 = vmatpush.msra.mxu0 0.0
        %570 = vmatpush.msra.mxu0 0.0
        %571 = vmatpush.msra.mxu0 0.0
        %572 = vmatpush.msra.mxu0 0.0
        %573 = vmatpush.msra.mxu0 0.0
        %574 = vmatpush.msra.mxu0 0.0
        %575 = vmatpush.msra.mxu0 0.0
        %576 = vmatpush.msra.mxu0 0.0
        %577 = vmatpush.msra.mxu0 0.0
        %578 = vmatpush.msra.mxu0 0.0
        %579 = vmatpush.msra.mxu0 0.0
        %580 = vmatpush.msra.mxu0 0.0
        %581 = vmatpush.msra.mxu0 %v451
        %582 = vmatmul.f32.gmra.mxu0 %v454
        %v583 = vpop.f32.mrf.mxu0
        %v584 = vadd.f32 0.0, %v583
        %585 = vmatmul.f32.gmra.mxu0 %v457
        %v586 = vpop.f32.mrf.mxu0
        %v587 = vadd.f32 0.0, %v586
        %588 = vmatmul.f32.gmra.mxu0 %v460
        %v589 = vpop.f32.mrf.mxu0
        %v590 = vadd.f32 0.0, %v589
        %591 = vmatmul.f32.gmra.mxu0 %v463
        %v592 = vpop.f32.mrf.mxu0
        %v593 = vadd.f32 0.0, %v592
        %594 = vmatmul.f32.gmra.mxu0 %v466
        %v595 = vpop.f32.mrf.mxu0
        %v596 = vadd.f32 0.0, %v595
        %597 = vmatmul.f32.gmra.mxu0 %v469
        %v598 = vpop.f32.mrf.mxu0
        %v599 = vadd.f32 0.0, %v598
        %600 = vmatmul.f32.gmra.mxu0 %v472
        %v601 = vpop.f32.mrf.mxu0
        %v602 = vadd.f32 0.0, %v601
        %603 = vmatmul.f32.gmra.mxu0 %v475
        %v604 = vpop.f32.mrf.mxu0
        %v605 = vadd.f32 0.0, %v604
        %606 = vmatmul.f32.gmra.mxu0 %v478
        %v607 = vpop.f32.mrf.mxu0
        %v608 = vadd.f32 0.0, %v607
        %609 = vmatmul.f32.gmra.mxu0 %v481
        %v610 = vpop.f32.mrf.mxu0
        %v611 = vadd.f32 0.0, %v610
        %612 = vmatmul.f32.gmra.mxu0 %v484
        %v613 = vpop.f32.mrf.mxu0
        %v614 = vadd.f32 0.0, %v613
        %615 = vmatmul.f32.gmra.mxu0 %v487
        %v616 = vpop.f32.mrf.mxu0
        %v617 = vadd.f32 0.0, %v616
        %618 = vmatmul.f32.gmra.mxu0 %v490
        %v619 = vpop.f32.mrf.mxu0
        %v620 = vadd.f32 0.0, %v619
        %621 = vmatmul.f32.gmra.mxu0 %v493
        %v622 = vpop.f32.mrf.mxu0
        %v623 = vadd.f32 0.0, %v622
        %624 = vmatmul.f32.gmra.mxu0 %v496
        %v625 = vpop.f32.mrf.mxu0
        %v626 = vadd.f32 0.0, %v625
        %627 = vmatmul.f32.gmra.mxu0 %v499
        %v628 = vpop.f32.mrf.mxu0
        %v629 = vadd.f32 0.0, %v628
        %630 = vdwg.mxu0
        %v631 = vadd.f32 %v224, %v519
        %v632 = vadd.f32 %v225, %v584
        %v633 = vadd.f32 %v226, %v522
        %v634 = vadd.f32 %v227, %v587
        %v635 = vadd.f32 %v228, %v525
        %v636 = vadd.f32 %v229, %v590
        %v637 = vadd.f32 %v230, %v528
        %v638 = vadd.f32 %v231, %v593
        %v639 = vadd.f32 %v232, %v531
        %v640 = vadd.f32 %v233, %v596
        %v641 = vadd.f32 %v234, %v534
        %v642 = vadd.f32 %v235, %v599
        %v643 = vadd.f32 %v236, %v537
        %v644 = vadd.f32 %v237, %v602
        %v645 = vadd.f32 %v238, %v540
        %v646 = vadd.f32 %v239, %v605
        %v647 = vadd.f32 %v240, %v543
        %v648 = vadd.f32 %v241, %v608
        %v649 = vadd.f32 %v242, %v546
        %v650 = vadd.f32 %v243, %v611
        %v651 = vadd.f32 %v244, %v549
        %v652 = vadd.f32 %v245, %v614
        %v653 = vadd.f32 %v246, %v552
        %v654 = vadd.f32 %v247, %v617
        %v655 = vadd.f32 %v248, %v555
        %v656 = vadd.f32 %v249, %v620
        %v657 = vadd.f32 %v250, %v558
        %v658 = vadd.f32 %v251, %v623
        %v659 = vadd.f32 %v252, %v561
        %v660 = vadd.f32 %v253, %v626
        %v661 = vadd.f32 %v254, %v564
        %v662 = vadd.f32 %v255, %v629
        %v663 = vpack.c.bf16 %v632, %v631
        %v664 = vpack.c.bf16 %v634, %v633
        %v665 = vpack.c.bf16 %v636, %v635
        %v666 = vpack.c.bf16 %v638, %v637
        %v667 = vpack.c.bf16 %v640, %v639
        %v668 = vpack.c.bf16 %v642, %v641
        %v669 = vpack.c.bf16 %v644, %v643
        %v670 = vpack.c.bf16 %v646, %v645
        %v671 = vpack.c.bf16 %v648, %v647
        %v672 = vpack.c.bf16 %v650, %v649
        %v673 = vpack.c.bf16 %v652, %v651
        %v674 = vpack.c.bf16 %v654, %v653
        %v675 = vpack.c.bf16 %v656, %v655
        %v676 = vpack.c.bf16 %v658, %v657
        %v677 = vpack.c.bf16 %v660, %v659
        %v678 = vpack.c.bf16 %v662, %v661
        %679 = vst [vmem:[%s209] sm:$0xff] %v663
        %680 = vst [vmem:[%s209 + $0x8] sm:$0xff] %v664
        %681 = vst [vmem:[%s209 + $0x10] sm:$0xff] %v665
        %682 = vst [vmem:[%s209 + $0x18] sm:$0xff] %v666
        %683 = vst [vmem:[%s209 + $0x20] sm:$0xff] %v667
        %684 = vst [vmem:[%s209 + $0x28] sm:$0xff] %v668
        %685 = vst [vmem:[%s209 + $0x30] sm:$0xff] %v669
        %686 = vst [vmem:[%s209 + $0x38] sm:$0xff] %v670
        %687 = vst [vmem:[%s209 + $0x40] sm:$0xff] %v671
        %688 = vst [vmem:[%s209 + $0x48] sm:$0xff] %v672
        %689 = vst [vmem:[%s209 + $0x50] sm:$0xff] %v673
        %690 = vst [vmem:[%s209 + $0x58] sm:$0xff] %v674
        %691 = vst [vmem:[%s209 + $0x60] sm:$0xff] %v675
        %692 = vst [vmem:[%s209 + $0x68] sm:$0xff] %v676
        %693 = vst [vmem:[%s209 + $0x70] sm:$0xff] %v677
        %694 = vst [vmem:[%s209 + $0x78] sm:$0xff] %v678
        %s695 = sand.u32 %s120, 1
        %s696 = scalar_lea.sflag [#allocation3], %s695
        %s697 = sand.u32 %s120, 1
        %s698 = smul.addr %s697, 128
        %s699 = scalar_lea.vmem [#allocation2], %s698
        // Predicated region
        $region37: #{tpu_custom_call.1} parent=35 // pred_check
          %p700 = pneg %p130
        $region38: #{tpu_custom_call.1} parent=35 // pred_check_branch
          %702 = sbr.rel (%p700) target = $region40
        $region39: #{tpu_custom_call.1} parent=35 // pred_region
          %s703 = smul.u32 16, %s18
          %705 = vsyncadd %s696, 0
          %s706 = smul.addr %s703, 2
          %s707 = smul.addr %s706, 4
          %s708 = scalar_lea.hbm %s4, %s707
          %s709 = sshll.u32 %s699, 4
          %s710 = int_to_ptr.vmem [resolvable:$true] %s709
          %s711 = sshll.u32 %s708, 4
          %s712 = int_to_ptr.hbm [resolvable:$true] %s711
          %717 = dma.vmem_to_hbm [thread:$0]  %s710, 2048, %s712, %s696, 128, 128, 8
        $region40: #{tpu_custom_call.1} parent=35 // pred_fallthru
          _
      $region36: #{tpu_custom_call.1} parent=5 // pred_fallthru
        _
      %p718 = scmp.le.s32.totalorder 2, %s13
      // Predicated region
      $region41: #{tpu_custom_call.1} parent=5 // pred_check
        %p719 = pneg %p718
      $region42: #{tpu_custom_call.1} parent=5 // pred_check_branch
        %721 = sbr.rel (%p719) target = $region44
      $region43: #{tpu_custom_call.1} parent=5 // pred_region
        %s722 = ssub.s32 %s13, 2
        // Predicated region
        $region45: #{tpu_custom_call.1} parent=43 // pred_check
          %p723 = pneg %p136
        $region46: #{tpu_custom_call.1} parent=43 // pred_check_branch
          %725 = sbr.rel (%p723) target = $region48
        $region47: #{tpu_custom_call.1} parent=43 // pred_region
          %s726 = sand.u32 %s121, 1
          %s727 = scalar_lea.sflag [#allocation3], %s726
          %s728 = sand.u32 %s121, 1
          %s729 = smul.addr %s728, 128
          %s730 = scalar_lea.vmem [#allocation2], %s729
          %732 = dma.done %s727, 2048
        $region48: #{tpu_custom_call.1} parent=43 // pred_fallthru
          _
      $region44: #{tpu_custom_call.1} parent=5 // pred_fallthru
        _
    $region6: #{tpu_custom_call.1} parent=1 // loop_footer
      %s17 = sadd.s32 1, %s13
    $region7: #{tpu_custom_call.1} parent=1 // loop_footer_branch
      %12 = sbr.rel target = $region3
    $region8: #{tpu_custom_call.1} parent=1 // loop_exit
      _
    %733 = vsyncpa [#allocation3], 1
    %s734 = scalar_lea.sflag [#allocation3], 1
    %735 = vsyncpa %s734, 1

</llo_original>
